<compile_context>
chip_gen: v6e
topology: v6e:2x2x1
jax: 0.10.0
libtpu: 0.0.40
codegen_flags: <defaults>
</compile_context>

<pallas_src>
import numpy as np
import jax
import jax.numpy as jnp
from jax.experimental import pallas as pl
from jax.experimental.pallas import tpu as pltpu


def lstm_kernel(xt_ref, wih_ref, whh_ref, b_ref, scale_ref, off_ref, out_ref):
    """Run the whole LSTM sequence in a single (ungridded) kernel invocation.

    xt_ref   : (T*B, E)  time-major flattened input (rows t*B:(t+1)*B = step t)
    wih_ref  : (E, 4H)   input->hidden weights, pre-transposed, i/f/o cols * 0.5
    whh_ref  : (H, 4H)   hidden->hidden weights, pre-transposed, i/f/o cols * 0.5
    b_ref    : (1, 4H)   combined bias (b_ih + b_hh), i/f/o cols * 0.5
    scale_ref: (1, 4H)   post-tanh scale  (0.5 on i/f/o lanes, 1.0 on g lanes)
    off_ref  : (1, 4H)   post-tanh offset (0.5 on i/f/o lanes, 0.0 on g lanes)
    out_ref  : (B, T*H)  lane-dense output: out[b, t*H:(t+1)*H] = h_t[b]
    """
    TB, E = xt_ref.shape
    H = whh_ref.shape[0]
    B = out_ref.shape[0]
    T = TB // B

    # ---- Prologue: input projection hoisted out of the recurrence ----------
    # One (T*B, E) x (E, 4H) MXU matmul; time-major so no in-kernel reshape.
    gx = jnp.dot(xt_ref[...], wih_ref[...],
                 preferred_element_type=jnp.float32) + b_ref[...]   # (T*B, 4H)

    whh = whh_ref[...]                 # (H, 4H), held in vregs across the loop
    act_scale = scale_ref[...]         # (1, 4H)
    act_off = off_ref[...]             # (1, 4H)

    h = jnp.zeros((B, H), jnp.float32)
    c = jnp.zeros((B, H), jnp.float32)

    # ---- Recurrence: only h @ W_hh + one wide tanh on the serial path ------
    # T is small and static -> fully-unrolled Python loop (all slices static).
    for t in range(T):
        gates = gx[t * B:(t + 1) * B, :] + jnp.dot(
            h, whh, preferred_element_type=jnp.float32)             # (B, 4H)
        # One full-width tanh + one FMA replaces 3 sigmoids + 1 tanh:
        #   i/f/o lanes were pre-scaled by 0.5 -> 0.5*tanh(x/2)+0.5 = sigmoid(x)
        #   g lanes untouched                  -> 1.0*tanh(x) +0.0 = tanh(x)
        act = jnp.tanh(gates) * act_scale + act_off                 # (B, 4H)
        i = act[:, 0 * H:1 * H]
        f = act[:, 1 * H:2 * H]
        g = act[:, 2 * H:3 * H]
        o = act[:, 3 * H:4 * H]
        c = f * c + i * g
        h = o * jnp.tanh(c)
        # Per-step store (off the dependency chain; hides under next step).
        out_ref[:, t * H:(t + 1) * H] = h.astype(out_ref.dtype)


@jax.jit
def lstm_forward(s, w_ih, w_hh, b_ih, b_hh):
    """Net.forward: run single-layer LSTM over s.

    s     : (B, T, E)  batch-first, like nn.LSTM(batch_first=True)
    w_ih  : (4H, E)    PyTorch weight_ih_l0
    w_hh  : (4H, H)    PyTorch weight_hh_l0
    b_ih  : (4H,)      PyTorch bias_ih_l0
    b_hh  : (4H,)      PyTorch bias_hh_l0
    returns (B, T, H)
    """
    B, T, E = s.shape
    H = w_hh.shape[1]
    f32 = jnp.float32

    # ---- Wrapper-side glue (plain JAX, done once per call) -----------------
    # Time-major flattened input: rows t*B:(t+1)*B hold time step t.
    xt = jnp.transpose(s, (1, 0, 2)).reshape(T * B, E)

    # Gate order is (i, f, g, o). Pre-scale the i/f/o columns by 0.5 so the
    # kernel can use a single wide tanh; build matching post-tanh scale/offset.
    col_scale = jnp.concatenate([
        jnp.full((H,), 0.5, f32), jnp.full((H,), 0.5, f32),
        jnp.full((H,), 1.0, f32), jnp.full((H,), 0.5, f32)]).reshape(1, 4 * H)
    act_offset = jnp.concatenate([
        jnp.full((H,), 0.5, f32), jnp.full((H,), 0.5, f32),
        jnp.full((H,), 0.0, f32), jnp.full((H,), 0.5, f32)]).reshape(1, 4 * H)

    wih_s = jnp.transpose(w_ih, (1, 0)) * col_scale          # (E, 4H)
    whh_s = jnp.transpose(w_hh, (1, 0)) * col_scale          # (H, 4H)
    bias_s = (b_ih + b_hh).reshape(1, 4 * H) * col_scale     # (1, 4H)

    # Single ungridded call: all ~50 KiB resident in VMEM, no pipeline
    # scaffolding / double-buffering, one DMA per operand.
    # NOTE: at larger batch (B >= ~16) add a leading "parallel" batch grid axis
    # to use both v7x TensorCores; pointless at B=2.
    out2d = pl.pallas_call(
        lstm_kernel,
        out_shape=jax.ShapeDtypeStruct((B, T * H), s.dtype),
        in_specs=[pl.BlockSpec(memory_space=pltpu.MemorySpace.VMEM)] * 6,
        out_specs=pl.BlockSpec(memory_space=pltpu.MemorySpace.VMEM),
    )(xt, wih_s, whh_s, bias_s, col_scale, act_offset)

    return out2d.reshape(B, T, H)              # back to batch-first (B, T, H)


def lstm_reference(s, w_ih, w_hh, b_ih, b_hh):
    """Pure-JAX reference matching torch.nn.LSTM semantics (gate order i,f,g,o)."""
    B, T, E = s.shape
    H = w_hh.shape[1]
    bias = b_ih + b_hh

    def step(carry, x_t):
        h, c = carry
        gates = x_t @ w_ih.T + h @ w_hh.T + bias
        i = jax.nn.sigmoid(gates[:, 0 * H:1 * H])
        f = jax.nn.sigmoid(gates[:, 1 * H:2 * H])
        g = jnp.tanh(gates[:, 2 * H:3 * H])
        o = jax.nn.sigmoid(gates[:, 3 * H:4 * H])
        c = f * c + i * g
        h = o * jnp.tanh(c)
        return (h, c), h

    h0 = jnp.zeros((B, H), jnp.float32)
    c0 = jnp.zeros((B, H), jnp.float32)
    _, ys = jax.lax.scan(step, (h0, c0), jnp.transpose(s, (1, 0, 2)))
    return jnp.transpose(ys, (1, 0, 2))


if __name__ == "__main__":
    # Small shapes consistent with the module: batch=2, seq=8, embedding=32,
    # hidden=32 (e.g. params.word_embedding_dim / params.word_hidden_dim).
    B, T, E, H = 2, 8, 32, 32

    key = jax.random.PRNGKey(0)
    ks = jax.random.split(key, 5)

    # Deterministic parameter init mimicking nn.LSTM's U(-1/sqrt(H), 1/sqrt(H)).
    bound = 1.0 / np.sqrt(H)
    w_ih = jax.random.uniform(ks[0], (4 * H, E), jnp.float32, -bound, bound)
    w_hh = jax.random.uniform(ks[1], (4 * H, H), jnp.float32, -bound, bound)
    b_ih = jax.random.uniform(ks[2], (4 * H,), jnp.float32, -bound, bound)
    b_hh = jax.random.uniform(ks[3], (4 * H,), jnp.float32, -bound, bound)

    s = jax.random.normal(ks[4], (B, T, E), jnp.float32)

    out = lstm_forward(s, w_ih, w_hh, b_ih, b_hh)
    out = jax.block_until_ready(out)

    ref = jax.block_until_ready(lstm_reference(s, w_ih, w_hh, b_ih, b_hh))
    assert out.shape == (B, T, H)
    np.testing.assert_allclose(np.asarray(out), np.asarray(ref),
                               rtol=1e-5, atol=1e-5)

    print("KERNEL_OK")
</pallas_src>

<mosaic_0001>
module attributes {stable_mosaic.version = 11 : i64} {
  func.func @lstm_kernel(%arg0: memref<16x32xf32, #tpu.memory_space<vmem>>, %arg1: memref<32x128xf32, #tpu.memory_space<vmem>>, %arg2: memref<32x128xf32, #tpu.memory_space<vmem>>, %arg3: memref<1x128xf32, #tpu.memory_space<vmem>>, %arg4: memref<1x128xf32, #tpu.memory_space<vmem>>, %arg5: memref<1x128xf32, #tpu.memory_space<vmem>>, %arg6: memref<2x256xf32, #tpu.memory_space<vmem>>) attributes {dimension_semantics = [], scalar_prefetch = 0 : i64, scratch_operands = 0 : i64, tpu.core_type = #tpu.core_type<tc>} {
    %c0 = arith.constant 0 : index
    %c0_0 = arith.constant 0 : index
    %0 = vector.load %arg0[%c0, %c0_0] : memref<16x32xf32, #tpu.memory_space<vmem>>, vector<16x32xf32>
    %c0_1 = arith.constant 0 : index
    %c0_2 = arith.constant 0 : index
    %1 = vector.load %arg1[%c0_1, %c0_2] : memref<32x128xf32, #tpu.memory_space<vmem>>, vector<32x128xf32>
    %cst = arith.constant dense<0.000000e+00> : vector<16x128xf32>
    %2 = tpu.matmul %0, %1, %cst {dimension_numbers = #tpu.dot_dimension_numbers<[1], [0], [0], [1], [0, 0, 1, 1], [], []>} : vector<16x32xf32>, vector<32x128xf32>, vector<16x128xf32> -> vector<16x128xf32>
    %c0_3 = arith.constant 0 : index
    %c0_4 = arith.constant 0 : index
    %3 = vector.load %arg3[%c0_3, %c0_4] : memref<1x128xf32, #tpu.memory_space<vmem>>, vector<1x128xf32>
    %4 = vector.broadcast %3 : vector<1x128xf32> to vector<16x128xf32>
    %5 = arith.addf %2, %4 : vector<16x128xf32>
    %c0_5 = arith.constant 0 : index
    %c0_6 = arith.constant 0 : index
    %6 = vector.load %arg2[%c0_5, %c0_6] : memref<32x128xf32, #tpu.memory_space<vmem>>, vector<32x128xf32>
    %c0_7 = arith.constant 0 : index
    %c0_8 = arith.constant 0 : index
    %7 = vector.load %arg4[%c0_7, %c0_8] : memref<1x128xf32, #tpu.memory_space<vmem>>, vector<1x128xf32>
    %c0_9 = arith.constant 0 : index
    %c0_10 = arith.constant 0 : index
    %8 = vector.load %arg5[%c0_9, %c0_10] : memref<1x128xf32, #tpu.memory_space<vmem>>, vector<1x128xf32>
    %cst_11 = arith.constant 0.000000e+00 : f32
    %9 = vector.broadcast %cst_11 : f32 to vector<2x32xf32>
    %cst_12 = arith.constant 0.000000e+00 : f32
    %10 = vector.broadcast %cst_12 : f32 to vector<2x32xf32>
    %11 = vector.extract_strided_slice %5 {offsets = [0, 0], sizes = [2, 128], strides = [1, 1]} : vector<16x128xf32> to vector<2x128xf32>
    %cst_13 = arith.constant dense<0.000000e+00> : vector<2x128xf32>
    %12 = tpu.matmul %9, %6, %cst_13 {dimension_numbers = #tpu.dot_dimension_numbers<[1], [0], [0], [1], [0, 0, 1, 1], [], []>} : vector<2x32xf32>, vector<32x128xf32>, vector<2x128xf32> -> vector<2x128xf32>
    %13 = arith.addf %11, %12 : vector<2x128xf32>
    %14 = math.tanh %13 : vector<2x128xf32>
    %15 = vector.broadcast %7 : vector<1x128xf32> to vector<2x128xf32>
    %16 = arith.mulf %14, %15 : vector<2x128xf32>
    %17 = vector.broadcast %8 : vector<1x128xf32> to vector<2x128xf32>
    %18 = arith.addf %16, %17 : vector<2x128xf32>
    %19 = vector.extract_strided_slice %18 {offsets = [0, 0], sizes = [2, 32], strides = [1, 1]} : vector<2x128xf32> to vector<2x32xf32>
    %20 = vector.extract_strided_slice %18 {offsets = [0, 32], sizes = [2, 32], strides = [1, 1]} : vector<2x128xf32> to vector<2x32xf32>
    %21 = vector.extract_strided_slice %18 {offsets = [0, 64], sizes = [2, 32], strides = [1, 1]} : vector<2x128xf32> to vector<2x32xf32>
    %22 = vector.extract_strided_slice %18 {offsets = [0, 96], sizes = [2, 32], strides = [1, 1]} : vector<2x128xf32> to vector<2x32xf32>
    %23 = arith.mulf %20, %10 : vector<2x32xf32>
    %24 = arith.mulf %19, %21 : vector<2x32xf32>
    %25 = arith.addf %23, %24 : vector<2x32xf32>
    %26 = math.tanh %25 : vector<2x32xf32>
    %27 = arith.mulf %22, %26 : vector<2x32xf32>
    %c0_14 = arith.constant 0 : index
    %c0_15 = arith.constant 0 : index
    %28 = vector.load %arg6[%c0_14, %c0_15] : memref<2x256xf32, #tpu.memory_space<vmem>>, vector<2x32xf32>
    tpu.vector_store %arg6[%c0_14, %c0_15], %27 {strides = array<i32>} : memref<2x256xf32, #tpu.memory_space<vmem>>, vector<2x32xf32>,
    %29 = vector.extract_strided_slice %5 {offsets = [2, 0], sizes = [2, 128], strides = [1, 1]} : vector<16x128xf32> to vector<2x128xf32>
    %cst_16 = arith.constant dense<0.000000e+00> : vector<2x128xf32>
    %30 = tpu.matmul %27, %6, %cst_16 {dimension_numbers = #tpu.dot_dimension_numbers<[1], [0], [0], [1], [0, 0, 1, 1], [], []>} : vector<2x32xf32>, vector<32x128xf32>, vector<2x128xf32> -> vector<2x128xf32>
    %31 = arith.addf %29, %30 : vector<2x128xf32>
    %32 = math.tanh %31 : vector<2x128xf32>
    %33 = vector.broadcast %7 : vector<1x128xf32> to vector<2x128xf32>
    %34 = arith.mulf %32, %33 : vector<2x128xf32>
    %35 = vector.broadcast %8 : vector<1x128xf32> to vector<2x128xf32>
    %36 = arith.addf %34, %35 : vector<2x128xf32>
    %37 = vector.extract_strided_slice %36 {offsets = [0, 0], sizes = [2, 32], strides = [1, 1]} : vector<2x128xf32> to vector<2x32xf32>
    %38 = vector.extract_strided_slice %36 {offsets = [0, 32], sizes = [2, 32], strides = [1, 1]} : vector<2x128xf32> to vector<2x32xf32>
    %39 = vector.extract_strided_slice %36 {offsets = [0, 64], sizes = [2, 32], strides = [1, 1]} : vector<2x128xf32> to vector<2x32xf32>
    %40 = vector.extract_strided_slice %36 {offsets = [0, 96], sizes = [2, 32], strides = [1, 1]} : vector<2x128xf32> to vector<2x32xf32>
    %41 = arith.mulf %38, %25 : vector<2x32xf32>
    %42 = arith.mulf %37, %39 : vector<2x32xf32>
    %43 = arith.addf %41, %42 : vector<2x32xf32>
    %44 = math.tanh %43 : vector<2x32xf32>
    %45 = arith.mulf %40, %44 : vector<2x32xf32>
    %c0_17 = arith.constant 0 : index
    %c32 = arith.constant 32 : index
    %46 = vector.load %arg6[%c0_17, %c32] : memref<2x256xf32, #tpu.memory_space<vmem>>, vector<2x32xf32>
    tpu.vector_store %arg6[%c0_17, %c32], %45 {strides = array<i32>} : memref<2x256xf32, #tpu.memory_space<vmem>>, vector<2x32xf32>,
    %47 = vector.extract_strided_slice %5 {offsets = [4, 0], sizes = [2, 128], strides = [1, 1]} : vector<16x128xf32> to vector<2x128xf32>
    %cst_18 = arith.constant dense<0.000000e+00> : vector<2x128xf32>
    %48 = tpu.matmul %45, %6, %cst_18 {dimension_numbers = #tpu.dot_dimension_numbers<[1], [0], [0], [1], [0, 0, 1, 1], [], []>} : vector<2x32xf32>, vector<32x128xf32>, vector<2x128xf32> -> vector<2x128xf32>
    %49 = arith.addf %47, %48 : vector<2x128xf32>
    %50 = math.tanh %49 : vector<2x128xf32>
    %51 = vector.broadcast %7 : vector<1x128xf32> to vector<2x128xf32>
    %52 = arith.mulf %50, %51 : vector<2x128xf32>
    %53 = vector.broadcast %8 : vector<1x128xf32> to vector<2x128xf32>
    %54 = arith.addf %52, %53 : vector<2x128xf32>
    %55 = vector.extract_strided_slice %54 {offsets = [0, 0], sizes = [2, 32], strides = [1, 1]} : vector<2x128xf32> to vector<2x32xf32>
    %56 = vector.extract_strided_slice %54 {offsets = [0, 32], sizes = [2, 32], strides = [1, 1]} : vector<2x128xf32> to vector<2x32xf32>
    %57 = vector.extract_strided_slice %54 {offsets = [0, 64], sizes = [2, 32], strides = [1, 1]} : vector<2x128xf32> to vector<2x32xf32>
    %58 = vector.extract_strided_slice %54 {offsets = [0, 96], sizes = [2, 32], strides = [1, 1]} : vector<2x128xf32> to vector<2x32xf32>
    %59 = arith.mulf %56, %43 : vector<2x32xf32>
    %60 = arith.mulf %55, %57 : vector<2x32xf32>
    %61 = arith.addf %59, %60 : vector<2x32xf32>
    %62 = math.tanh %61 : vector<2x32xf32>
    %63 = arith.mulf %58, %62 : vector<2x32xf32>
    %c0_19 = arith.constant 0 : index
    %c64 = arith.constant 64 : index
    %64 = vector.load %arg6[%c0_19, %c64] : memref<2x256xf32, #tpu.memory_space<vmem>>, vector<2x32xf32>
    tpu.vector_store %arg6[%c0_19, %c64], %63 {strides = array<i32>} : memref<2x256xf32, #tpu.memory_space<vmem>>, vector<2x32xf32>,
    %65 = vector.extract_strided_slice %5 {offsets = [6, 0], sizes = [2, 128], strides = [1, 1]} : vector<16x128xf32> to vector<2x128xf32>
    %cst_20 = arith.constant dense<0.000000e+00> : vector<2x128xf32>
    %66 = tpu.matmul %63, %6, %cst_20 {dimension_numbers = #tpu.dot_dimension_numbers<[1], [0], [0], [1], [0, 0, 1, 1], [], []>} : vector<2x32xf32>, vector<32x128xf32>, vector<2x128xf32> -> vector<2x128xf32>
    %67 = arith.addf %65, %66 : vector<2x128xf32>
    %68 = math.tanh %67 : vector<2x128xf32>
    %69 = vector.broadcast %7 : vector<1x128xf32> to vector<2x128xf32>
    %70 = arith.mulf %68, %69 : vector<2x128xf32>
    %71 = vector.broadcast %8 : vector<1x128xf32> to vector<2x128xf32>
    %72 = arith.addf %70, %71 : vector<2x128xf32>
    %73 = vector.extract_strided_slice %72 {offsets = [0, 0], sizes = [2, 32], strides = [1, 1]} : vector<2x128xf32> to vector<2x32xf32>
    %74 = vector.extract_strided_slice %72 {offsets = [0, 32], sizes = [2, 32], strides = [1, 1]} : vector<2x128xf32> to vector<2x32xf32>
    %75 = vector.extract_strided_slice %72 {offsets = [0, 64], sizes = [2, 32], strides = [1, 1]} : vector<2x128xf32> to vector<2x32xf32>
    %76 = vector.extract_strided_slice %72 {offsets = [0, 96], sizes = [2, 32], strides = [1, 1]} : vector<2x128xf32> to vector<2x32xf32>
    %77 = arith.mulf %74, %61 : vector<2x32xf32>
    %78 = arith.mulf %73, %75 : vector<2x32xf32>
    %79 = arith.addf %77, %78 : vector<2x32xf32>
    %80 = math.tanh %79 : vector<2x32xf32>
    %81 = arith.mulf %76, %80 : vector<2x32xf32>
    %c0_21 = arith.constant 0 : index
    %c96 = arith.constant 96 : index
    %82 = vector.load %arg6[%c0_21, %c96] : memref<2x256xf32, #tpu.memory_space<vmem>>, vector<2x32xf32>
    tpu.vector_store %arg6[%c0_21, %c96], %81 {strides = array<i32>} : memref<2x256xf32, #tpu.memory_space<vmem>>, vector<2x32xf32>,
    %83 = vector.extract_strided_slice %5 {offsets = [8, 0], sizes = [2, 128], strides = [1, 1]} : vector<16x128xf32> to vector<2x128xf32>
    %cst_22 = arith.constant dense<0.000000e+00> : vector<2x128xf32>
    %84 = tpu.matmul %81, %6, %cst_22 {dimension_numbers = #tpu.dot_dimension_numbers<[1], [0], [0], [1], [0, 0, 1, 1], [], []>} : vector<2x32xf32>, vector<32x128xf32>, vector<2x128xf32> -> vector<2x128xf32>
    %85 = arith.addf %83, %84 : vector<2x128xf32>
    %86 = math.tanh %85 : vector<2x128xf32>
    %87 = vector.broadcast %7 : vector<1x128xf32> to vector<2x128xf32>
    %88 = arith.mulf %86, %87 : vector<2x128xf32>
    %89 = vector.broadcast %8 : vector<1x128xf32> to vector<2x128xf32>
    %90 = arith.addf %88, %89 : vector<2x128xf32>
    %91 = vector.extract_strided_slice %90 {offsets = [0, 0], sizes = [2, 32], strides = [1, 1]} : vector<2x128xf32> to vector<2x32xf32>
    %92 = vector.extract_strided_slice %90 {offsets = [0, 32], sizes = [2, 32], strides = [1, 1]} : vector<2x128xf32> to vector<2x32xf32>
    %93 = vector.extract_strided_slice %90 {offsets = [0, 64], sizes = [2, 32], strides = [1, 1]} : vector<2x128xf32> to vector<2x32xf32>
    %94 = vector.extract_strided_slice %90 {offsets = [0, 96], sizes = [2, 32], strides = [1, 1]} : vector<2x128xf32> to vector<2x32xf32>
    %95 = arith.mulf %92, %79 : vector<2x32xf32>
    %96 = arith.mulf %91, %93 : vector<2x32xf32>
    %97 = arith.addf %95, %96 : vector<2x32xf32>
    %98 = math.tanh %97 : vector<2x32xf32>
    %99 = arith.mulf %94, %98 : vector<2x32xf32>
    %c0_23 = arith.constant 0 : index
    %c128 = arith.constant 128 : index
    %100 = vector.load %arg6[%c0_23, %c128] : memref<2x256xf32, #tpu.memory_space<vmem>>, vector<2x32xf32>
    tpu.vector_store %arg6[%c0_23, %c128], %99 {strides = array<i32>} : memref<2x256xf32, #tpu.memory_space<vmem>>, vector<2x32xf32>,
    %101 = vector.extract_strided_slice %5 {offsets = [10, 0], sizes = [2, 128], strides = [1, 1]} : vector<16x128xf32> to vector<2x128xf32>
    %cst_24 = arith.constant dense<0.000000e+00> : vector<2x128xf32>
    %102 = tpu.matmul %99, %6, %cst_24 {dimension_numbers = #tpu.dot_dimension_numbers<[1], [0], [0], [1], [0, 0, 1, 1], [], []>} : vector<2x32xf32>, vector<32x128xf32>, vector<2x128xf32> -> vector<2x128xf32>
    %103 = arith.addf %101, %102 : vector<2x128xf32>
    %104 = math.tanh %103 : vector<2x128xf32>
    %105 = vector.broadcast %7 : vector<1x128xf32> to vector<2x128xf32>
    %106 = arith.mulf %104, %105 : vector<2x128xf32>
    %107 = vector.broadcast %8 : vector<1x128xf32> to vector<2x128xf32>
    %108 = arith.addf %106, %107 : vector<2x128xf32>
    %109 = vector.extract_strided_slice %108 {offsets = [0, 0], sizes = [2, 32], strides = [1, 1]} : vector<2x128xf32> to vector<2x32xf32>
    %110 = vector.extract_strided_slice %108 {offsets = [0, 32], sizes = [2, 32], strides = [1, 1]} : vector<2x128xf32> to vector<2x32xf32>
    %111 = vector.extract_strided_slice %108 {offsets = [0, 64], sizes = [2, 32], strides = [1, 1]} : vector<2x128xf32> to vector<2x32xf32>
    %112 = vector.extract_strided_slice %108 {offsets = [0, 96], sizes = [2, 32], strides = [1, 1]} : vector<2x128xf32> to vector<2x32xf32>
    %113 = arith.mulf %110, %97 : vector<2x32xf32>
    %114 = arith.mulf %109, %111 : vector<2x32xf32>
    %115 = arith.addf %113, %114 : vector<2x32xf32>
    %116 = math.tanh %115 : vector<2x32xf32>
    %117 = arith.mulf %112, %116 : vector<2x32xf32>
    %c0_25 = arith.constant 0 : index
    %c160 = arith.constant 160 : index
    %118 = vector.load %arg6[%c0_25, %c160] : memref<2x256xf32, #tpu.memory_space<vmem>>, vector<2x32xf32>
    tpu.vector_store %arg6[%c0_25, %c160], %117 {strides = array<i32>} : memref<2x256xf32, #tpu.memory_space<vmem>>, vector<2x32xf32>,
    %119 = vector.extract_strided_slice %5 {offsets = [12, 0], sizes = [2, 128], strides = [1, 1]} : vector<16x128xf32> to vector<2x128xf32>
    %cst_26 = arith.constant dense<0.000000e+00> : vector<2x128xf32>
    %120 = tpu.matmul %117, %6, %cst_26 {dimension_numbers = #tpu.dot_dimension_numbers<[1], [0], [0], [1], [0, 0, 1, 1], [], []>} : vector<2x32xf32>, vector<32x128xf32>, vector<2x128xf32> -> vector<2x128xf32>
    %121 = arith.addf %119, %120 : vector<2x128xf32>
    %122 = math.tanh %121 : vector<2x128xf32>
    %123 = vector.broadcast %7 : vector<1x128xf32> to vector<2x128xf32>
    %124 = arith.mulf %122, %123 : vector<2x128xf32>
    %125 = vector.broadcast %8 : vector<1x128xf32> to vector<2x128xf32>
    %126 = arith.addf %124, %125 : vector<2x128xf32>
    %127 = vector.extract_strided_slice %126 {offsets = [0, 0], sizes = [2, 32], strides = [1, 1]} : vector<2x128xf32> to vector<2x32xf32>
    %128 = vector.extract_strided_slice %126 {offsets = [0, 32], sizes = [2, 32], strides = [1, 1]} : vector<2x128xf32> to vector<2x32xf32>
    %129 = vector.extract_strided_slice %126 {offsets = [0, 64], sizes = [2, 32], strides = [1, 1]} : vector<2x128xf32> to vector<2x32xf32>
    %130 = vector.extract_strided_slice %126 {offsets = [0, 96], sizes = [2, 32], strides = [1, 1]} : vector<2x128xf32> to vector<2x32xf32>
    %131 = arith.mulf %128, %115 : vector<2x32xf32>
    %132 = arith.mulf %127, %129 : vector<2x32xf32>
    %133 = arith.addf %131, %132 : vector<2x32xf32>
    %134 = math.tanh %133 : vector<2x32xf32>
    %135 = arith.mulf %130, %134 : vector<2x32xf32>
    %c0_27 = arith.constant 0 : index
    %c192 = arith.constant 192 : index
    %136 = vector.load %arg6[%c0_27, %c192] : memref<2x256xf32, #tpu.memory_space<vmem>>, vector<2x32xf32>
    tpu.vector_store %arg6[%c0_27, %c192], %135 {strides = array<i32>} : memref<2x256xf32, #tpu.memory_space<vmem>>, vector<2x32xf32>,
    %137 = vector.extract_strided_slice %5 {offsets = [14, 0], sizes = [2, 128], strides = [1, 1]} : vector<16x128xf32> to vector<2x128xf32>
    %cst_28 = arith.constant dense<0.000000e+00> : vector<2x128xf32>
    %138 = tpu.matmul %135, %6, %cst_28 {dimension_numbers = #tpu.dot_dimension_numbers<[1], [0], [0], [1], [0, 0, 1, 1], [], []>} : vector<2x32xf32>, vector<32x128xf32>, vector<2x128xf32> -> vector<2x128xf32>
    %139 = arith.addf %137, %138 : vector<2x128xf32>
    %140 = math.tanh %139 : vector<2x128xf32>
    %141 = vector.broadcast %7 : vector<1x128xf32> to vector<2x128xf32>
    %142 = arith.mulf %140, %141 : vector<2x128xf32>
    %143 = vector.broadcast %8 : vector<1x128xf32> to vector<2x128xf32>
    %144 = arith.addf %142, %143 : vector<2x128xf32>
    %145 = vector.extract_strided_slice %144 {offsets = [0, 0], sizes = [2, 32], strides = [1, 1]} : vector<2x128xf32> to vector<2x32xf32>
    %146 = vector.extract_strided_slice %144 {offsets = [0, 32], sizes = [2, 32], strides = [1, 1]} : vector<2x128xf32> to vector<2x32xf32>
    %147 = vector.extract_strided_slice %144 {offsets = [0, 64], sizes = [2, 32], strides = [1, 1]} : vector<2x128xf32> to vector<2x32xf32>
    %148 = vector.extract_strided_slice %144 {offsets = [0, 96], sizes = [2, 32], strides = [1, 1]} : vector<2x128xf32> to vector<2x32xf32>
    %149 = arith.mulf %146, %133 : vector<2x32xf32>
    %150 = arith.mulf %145, %147 : vector<2x32xf32>
    %151 = arith.addf %149, %150 : vector<2x32xf32>
    %152 = math.tanh %151 : vector<2x32xf32>
    %153 = arith.mulf %148, %152 : vector<2x32xf32>
    %c0_29 = arith.constant 0 : index
    %c224 = arith.constant 224 : index
    %154 = vector.load %arg6[%c0_29, %c224] : memref<2x256xf32, #tpu.memory_space<vmem>>, vector<2x32xf32>
    tpu.vector_store %arg6[%c0_29, %c224], %153 {strides = array<i32>} : memref<2x256xf32, #tpu.memory_space<vmem>>, vector<2x32xf32>,
    return
  }
}

</mosaic_0001>

<llo_original>
// kernel: lstm_forward.1
$region0: #{lstm_forward.1}
  #allocation0 [shape = 'u32[]', space=smem, size = 0x4, offset = 0x4, fixed_abs, tag = 'smem constant byte address 0x4 - core index']
  #allocation1 [shape = 'u32[144,128]{1,0:T(1,128)}', space=vmem, size = 0x12000, scoped, tag = 'internal scratch']
  %s0 = inlined_call_operand.vmem [shape: f32[16,32], index: 0, kind: input, shape index: {}]
  %s1 = inlined_call_operand.vmem [shape: f32[32,128], index: 1, kind: input, shape index: {}]
  %s2 = inlined_call_operand.vmem [shape: f32[32,128], index: 2, kind: input, shape index: {}]
  %s3 = inlined_call_operand.vmem [shape: f32[1,128], index: 3, kind: input, shape index: {}]
  %s4 = inlined_call_operand.vmem [shape: f32[1,128], index: 4, kind: input, shape index: {}]
  %s5 = inlined_call_operand.vmem [shape: f32[1,128], index: 5, kind: input, shape index: {}]
  %s6 = inlined_call_operand.vmem [shape: f32[2,256], index: 6, kind: output, shape index: {}]
  %s7 = sld [smem:[#allocation0]]
  $region34: #{lstm_forward.1} parent=0
    _
  %s9 = ssub.s32 1, %s7
  %s10 = scalar_select 0, %s9, %s7
  // Predicated region
  $region2: #{lstm_forward.1} parent=0 // pred_check
    _
  $region3: #{lstm_forward.1} parent=0 // pred_check_branch
    %12 = sbr.rel (0) target = $region5
  $region4: #{lstm_forward.1} parent=0 // pred_region
    _
  $region5: #{lstm_forward.1} parent=0 // pred_fallthru
    _
  // Predicated region
  $region6: #{lstm_forward.1} parent=0 // pred_check
    _
  $region7: #{lstm_forward.1} parent=0 // pred_check_branch
    %14 = sbr.rel (0) target = $region9
  $region8: #{lstm_forward.1} parent=0 // pred_region
    _
  $region9: #{lstm_forward.1} parent=0 // pred_fallthru
    _
  // Predicated region
  $region10: #{lstm_forward.1} parent=0 // pred_check
    _
  $region11: #{lstm_forward.1} parent=0 // pred_check_branch
    %16 = sbr.rel (0) target = $region13
  $region12: #{lstm_forward.1} parent=0 // pred_region
    _
  $region13: #{lstm_forward.1} parent=0 // pred_fallthru
    _
  // Predicated region
  $region14: #{lstm_forward.1} parent=0 // pred_check
    _
  $region15: #{lstm_forward.1} parent=0 // pred_check_branch
    %18 = sbr.rel (0) target = $region17
  $region16: #{lstm_forward.1} parent=0 // pred_region
    _
  $region17: #{lstm_forward.1} parent=0 // pred_fallthru
    _
  // Predicated region
  $region18: #{lstm_forward.1} parent=0 // pred_check
    _
  $region19: #{lstm_forward.1} parent=0 // pred_check_branch
    %20 = sbr.rel (0) target = $region21
  $region20: #{lstm_forward.1} parent=0 // pred_region
    _
  $region21: #{lstm_forward.1} parent=0 // pred_fallthru
    _
  // Predicated region
  $region22: #{lstm_forward.1} parent=0 // pred_check
    _
  $region23: #{lstm_forward.1} parent=0 // pred_check_branch
    %22 = sbr.rel (0) target = $region25
  $region24: #{lstm_forward.1} parent=0 // pred_region
    _
  $region25: #{lstm_forward.1} parent=0 // pred_fallthru
    _
  %v23 = vld [vmem:[%s0] sm:$0xff]
  %v24 = vld [vmem:[%s0 + $0x8] sm:$0xff]
  %v25 = vld [vmem:[%s1] sm:$0xff]
  %v26 = vld [vmem:[%s1 + $0x8] sm:$0xff]
  %v27 = vld [vmem:[%s1 + $0x10] sm:$0xff]
  %v28 = vld [vmem:[%s1 + $0x18] sm:$0xff]
  %v29 = vld [vmem:[%s3] sm:$0x1]
  %v31 = vlaneseq
  %v32 = vshrl.u32 %v31, 7
  %v33 = vsub.s32 0, %v32
  %v34 = vrot.slane %v29, %v33
  %vm36 = vcmask 261120
  %v38 = vsel %vm36, %v23, 0
  %v41 = vsel %vm36, %v24, 0
  %43 = vmatprep.subr.mxu0 0.0
  %44 = vmatpush1.msra.mxu0 0.0
  %45 = vmatprep.subr.mxu0 0.0
  %46 = vmatpush1.msra.mxu0 0.0
  %47 = vmatprep.subr.mxu0 0.0
  %48 = vmatpush1.msra.mxu0 0.0
  %49 = vmatprep.subr.mxu0 0.0
  %50 = vmatpush1.msra.mxu0 0.0
  %51 = vmatprep.subr.mxu0 0.0
  %52 = vmatpush1.msra.mxu0 0.0
  %53 = vmatprep.subr.mxu0 0.0
  %54 = vmatpush1.msra.mxu0 0.0
  %55 = vmatprep.subr.mxu0 0.0
  %56 = vmatpush1.msra.mxu0 0.0
  %57 = vmatprep.subr.mxu0 0.0
  %58 = vmatpush1.msra.mxu0 0.0
  %59 = vmatprep.subr.mxu0 0.0
  %60 = vmatpush1.msra.mxu0 0.0
  %61 = vmatprep.subr.mxu0 0.0
  %62 = vmatpush1.msra.mxu0 0.0
  %63 = vmatprep.subr.mxu0 0.0
  %64 = vmatpush1.msra.mxu0 0.0
  %65 = vmatprep.subr.mxu0 0.0
  %66 = vmatpush1.msra.mxu0 0.0
  %67 = vmatprep.subr.mxu0 0.0
  %68 = vmatpush1.msra.mxu0 %v28
  %69 = vmatprep.subr.mxu0 0.0
  %70 = vmatpush1.msra.mxu0 %v27
  %71 = vmatprep.subr.mxu0 0.0
  %72 = vmatpush1.msra.mxu0 %v26
  %73 = vmatprep.subr.mxu0 0.0
  %74 = vmatpush1.msra.mxu0 %v25
  %75 = vmatprep.subr.mxu0 0.0
  %76 = vmatpush2.msra.mxu0 0.0
  %77 = vmatprep.subr.mxu0 0.0
  %78 = vmatpush2.msra.mxu0 0.0
  %79 = vmatprep.subr.mxu0 0.0
  %80 = vmatpush2.msra.mxu0 0.0
  %81 = vmatprep.subr.mxu0 0.0
  %82 = vmatpush2.msra.mxu0 0.0
  %83 = vmatprep.subr.mxu0 0.0
  %84 = vmatpush2.msra.mxu0 0.0
  %85 = vmatprep.subr.mxu0 0.0
  %86 = vmatpush2.msra.mxu0 0.0
  %87 = vmatprep.subr.mxu0 0.0
  %88 = vmatpush2.msra.mxu0 0.0
  %89 = vmatprep.subr.mxu0 0.0
  %90 = vmatpush2.msra.mxu0 0.0
  %91 = vmatprep.subr.mxu0 0.0
  %92 = vmatpush2.msra.mxu0 0.0
  %93 = vmatprep.subr.mxu0 0.0
  %94 = vmatpush2.msra.mxu0 0.0
  %95 = vmatprep.subr.mxu0 0.0
  %96 = vmatpush2.msra.mxu0 0.0
  %97 = vmatprep.subr.mxu0 0.0
  %98 = vmatpush2.msra.mxu0 0.0
  %99 = vmatprep.subr.mxu0 0.0
  %100 = vmatpush2.msra.mxu0 0.0
  %101 = vmatprep.subr.mxu0 0.0
  %102 = vmatpush2.msra.mxu0 0.0
  %103 = vmatprep.subr.mxu0 0.0
  %104 = vmatpush2.msra.mxu0 0.0
  %105 = vmatprep.subr.mxu0 0.0
  %106 = vmatpush2.msra.mxu0 0.0
  %107 = vmatprep.mubr.f32.mxu0 0.0
  %108 = vmatmul.mubr.f32.gmra.mxu0 %v38
  %v109 = vpop.f32.mrf.mxu0
  %v110 = vadd.f32 %v34, %v109
  %v111 = vpop.f32.mrf.mxu0
  %112 = vmatprep.mubr.f32.mxu0 0.0
  %113 = vmatmul.mubr.f32.gmra.mxu0 %v41
  %v114 = vpop.f32.mrf.mxu0
  %v115 = vadd.f32 %v34, %v114
  %v116 = vpop.f32.mrf.mxu0
  %117 = vdwg.mxu0
  %v118 = vld [vmem:[%s2] sm:$0xff]
  %v119 = vld [vmem:[%s2 + $0x8] sm:$0xff]
  %v120 = vld [vmem:[%s2 + $0x10] sm:$0xff]
  %v121 = vld [vmem:[%s2 + $0x18] sm:$0xff]
  %v122 = vld [vmem:[%s4] sm:$0x1]
  %v123 = vld [vmem:[%s5] sm:$0x1]
  %v125 = vsel %vm36, 0.0, 0
  %127 = vmatprep.subr.mxu0 0.0
  %128 = vmatpush1.msra.mxu0 0.0
  %129 = vmatprep.subr.mxu0 0.0
  %130 = vmatpush1.msra.mxu0 0.0
  %131 = vmatprep.subr.mxu0 0.0
  %132 = vmatpush1.msra.mxu0 0.0
  %133 = vmatprep.subr.mxu0 0.0
  %134 = vmatpush1.msra.mxu0 0.0
  %135 = vmatprep.subr.mxu0 0.0
  %136 = vmatpush1.msra.mxu0 0.0
  %137 = vmatprep.subr.mxu0 0.0
  %138 = vmatpush1.msra.mxu0 0.0
  %139 = vmatprep.subr.mxu0 0.0
  %140 = vmatpush1.msra.mxu0 0.0
  %141 = vmatprep.subr.mxu0 0.0
  %142 = vmatpush1.msra.mxu0 0.0
  %143 = vmatprep.subr.mxu0 0.0
  %144 = vmatpush1.msra.mxu0 0.0
  %145 = vmatprep.subr.mxu0 0.0
  %146 = vmatpush1.msra.mxu0 0.0
  %147 = vmatprep.subr.mxu0 0.0
  %148 = vmatpush1.msra.mxu0 0.0
  %149 = vmatprep.subr.mxu0 0.0
  %150 = vmatpush1.msra.mxu0 0.0
  %151 = vmatprep.subr.mxu0 0.0
  %152 = vmatpush1.msra.mxu0 %v121
  %153 = vmatprep.subr.mxu0 0.0
  %154 = vmatpush1.msra.mxu0 %v120
  %155 = vmatprep.subr.mxu0 0.0
  %156 = vmatpush1.msra.mxu0 %v119
  %157 = vmatprep.subr.mxu0 0.0
  %158 = vmatpush1.msra.mxu0 %v118
  %159 = vmatprep.subr.mxu0 0.0
  %160 = vmatpush2.msra.mxu0 0.0
  %161 = vmatprep.subr.mxu0 0.0
  %162 = vmatpush2.msra.mxu0 0.0
  %163 = vmatprep.subr.mxu0 0.0
  %164 = vmatpush2.msra.mxu0 0.0
  %165 = vmatprep.subr.mxu0 0.0
  %166 = vmatpush2.msra.mxu0 0.0
  %167 = vmatprep.subr.mxu0 0.0
  %168 = vmatpush2.msra.mxu0 0.0
  %169 = vmatprep.subr.mxu0 0.0
  %170 = vmatpush2.msra.mxu0 0.0
  %171 = vmatprep.subr.mxu0 0.0
  %172 = vmatpush2.msra.mxu0 0.0
  %173 = vmatprep.subr.mxu0 0.0
  %174 = vmatpush2.msra.mxu0 0.0
  %175 = vmatprep.subr.mxu0 0.0
  %176 = vmatpush2.msra.mxu0 0.0
  %177 = vmatprep.subr.mxu0 0.0
  %178 = vmatpush2.msra.mxu0 0.0
  %179 = vmatprep.subr.mxu0 0.0
  %180 = vmatpush2.msra.mxu0 0.0
  %181 = vmatprep.subr.mxu0 0.0
  %182 = vmatpush2.msra.mxu0 0.0
  %183 = vmatprep.subr.mxu0 0.0
  %184 = vmatpush2.msra.mxu0 0.0
  %185 = vmatprep.subr.mxu0 0.0
  %186 = vmatpush2.msra.mxu0 0.0
  %187 = vmatprep.subr.mxu0 0.0
  %188 = vmatpush2.msra.mxu0 0.0
  %189 = vmatprep.subr.mxu0 0.0
  %190 = vmatpush2.msra.mxu0 0.0
  %191 = vmatprep.mubr.f32.mxu0 0.0
  %192 = vmatmul.mubr.f32.gmra.mxu0 %v125
  %v193 = vpop.f32.mrf.mxu0
  %v194 = vadd.f32 0.0, %v193
  %v195 = vpop.f32.mrf.mxu0
  %196 = vdwg.mxu0
  %v197 = vadd.f32 %v110, %v194
  %v198 = vtanh.pop %v197
  %v200 = vlaneseq
  %v201 = vshrl.u32 %v200, 7
  %v202 = vsub.s32 0, %v201
  %v203 = vrot.slane %v122, %v202
  %v205 = vmul.f32 %v198, %v203
  %v207 = vlaneseq
  %v208 = vshrl.u32 %v207, 7
  %v209 = vsub.s32 0, %v208
  %v210 = vrot.slane %v123, %v209
  %v212 = vadd.f32 %v205, %v210
  %v213 = vmul.f32 %v212, 0.0
  %215 = vrot.lane.b32.xlu0 %v212, 64
  %v216 = vpop.permute.xlu0 %215
  %v218 = vmul.f32 %v212, %v216
  %220 = vrot.lane.b32.xlu0 %v218, 32
  %v221 = vpop.permute.xlu0 %220
  %v223 = vadd.f32 %v213, %v221
  %v224 = vtanh.pop %v223
  %226 = vrot.lane.b32.xlu0 %v224, 64
  %v227 = vpop.permute.xlu0 %226
  %v229 = vmul.f32 %v212, %v227
  %v232 = vunpack.c.l.s4 1983009808
  %v233 = vunpack.c.0.s8 %v232
  %v234 = vlaneseq
  %v235 = vshrl.u32 %v234, 7
  %v236 = vsub.s32 %v233, %v235
  %v237 = vrot.slane %v229, %v236
  %238 = vrot.lane.b32.xlu0 %v237, 32
  %v239 = vpop.permute.xlu0 %238
  %vm241 = vcmask 254976
  %242 = vst.msk [vmem:[%s6] sm:$0x3] %vm241, %v239
  %243 = vrot.lane.b32.xlu0 %v229, 32
  %v244 = vpop.permute.xlu0 %243
  %v245 = vsel %vm36, %v244, 0
  %247 = vmatprep.subr.mxu0 0.0
  %248 = vmatpush1.msra.mxu0 0.0
  %249 = vmatprep.subr.mxu0 0.0
  %250 = vmatpush1.msra.mxu0 0.0
  %251 = vmatprep.subr.mxu0 0.0
  %252 = vmatpush1.msra.mxu0 0.0
  %253 = vmatprep.subr.mxu0 0.0
  %254 = vmatpush1.msra.mxu0 0.0
  %255 = vmatprep.subr.mxu0 0.0
  %256 = vmatpush1.msra.mxu0 0.0
  %257 = vmatprep.subr.mxu0 0.0
  %258 = vmatpush1.msra.mxu0 0.0
  %259 = vmatprep.subr.mxu0 0.0
  %260 = vmatpush1.msra.mxu0 0.0
  %261 = vmatprep.subr.mxu0 0.0
  %262 = vmatpush1.msra.mxu0 0.0
  %263 = vmatprep.subr.mxu0 0.0
  %264 = vmatpush1.msra.mxu0 0.0
  %265 = vmatprep.subr.mxu0 0.0
  %266 = vmatpush1.msra.mxu0 0.0
  %267 = vmatprep.subr.mxu0 0.0
  %268 = vmatpush1.msra.mxu0 0.0
  %269 = vmatprep.subr.mxu0 0.0
  %270 = vmatpush1.msra.mxu0 0.0
  %271 = vmatprep.subr.mxu0 0.0
  %272 = vmatpush1.msra.mxu0 %v121
  %273 = vmatprep.subr.mxu0 0.0
  %274 = vmatpush1.msra.mxu0 %v120
  %275 = vmatprep.subr.mxu0 0.0
  %276 = vmatpush1.msra.mxu0 %v119
  %277 = vmatprep.subr.mxu0 0.0
  %278 = vmatpush1.msra.mxu0 %v118
  %279 = vmatprep.subr.mxu0 0.0
  %280 = vmatpush2.msra.mxu0 0.0
  %281 = vmatprep.subr.mxu0 0.0
  %282 = vmatpush2.msra.mxu0 0.0
  %283 = vmatprep.subr.mxu0 0.0
  %284 = vmatpush2.msra.mxu0 0.0
  %285 = vmatprep.subr.mxu0 0.0
  %286 = vmatpush2.msra.mxu0 0.0
  %287 = vmatprep.subr.mxu0 0.0
  %288 = vmatpush2.msra.mxu0 0.0
  %289 = vmatprep.subr.mxu0 0.0
  %290 = vmatpush2.msra.mxu0 0.0
  %291 = vmatprep.subr.mxu0 0.0
  %292 = vmatpush2.msra.mxu0 0.0
  %293 = vmatprep.subr.mxu0 0.0
  %294 = vmatpush2.msra.mxu0 0.0
  %295 = vmatprep.subr.mxu0 0.0
  %296 = vmatpush2.msra.mxu0 0.0
  %297 = vmatprep.subr.mxu0 0.0
  %298 = vmatpush2.msra.mxu0 0.0
  %299 = vmatprep.subr.mxu0 0.0
  %300 = vmatpush2.msra.mxu0 0.0
  %301 = vmatprep.subr.mxu0 0.0
  %302 = vmatpush2.msra.mxu0 0.0
  %303 = vmatprep.subr.mxu0 0.0
  %304 = vmatpush2.msra.mxu0 0.0
  %305 = vmatprep.subr.mxu0 0.0
  %306 = vmatpush2.msra.mxu0 0.0
  %307 = vmatprep.subr.mxu0 0.0
  %308 = vmatpush2.msra.mxu0 0.0
  %309 = vmatprep.subr.mxu0 0.0
  %310 = vmatpush2.msra.mxu0 0.0
  %311 = vmatprep.mubr.f32.mxu0 0.0
  %312 = vmatmul.mubr.f32.gmra.mxu0 %v245
  %v313 = vpop.f32.mrf.mxu0
  %v314 = vadd.f32 0.0, %v313
  %v315 = vpop.f32.mrf.mxu0
  %316 = vdwg.mxu0
  %v318 = vrot.slane %v314, 6
  %v320 = vadd.f32 %v110, %v318
  %v321 = vtanh.pop %v320
  %v322 = vmul.f32 %v321, %v203
  %v323 = vadd.f32 %v322, %v210
  %v325 = vrot.slane %v223, 6
  %v327 = vmul.f32 %v323, %v325
  %329 = vrot.lane.b32.xlu0 %v323, 64
  %v330 = vpop.permute.xlu0 %329
  %v332 = vmul.f32 %v323, %v330
  %334 = vrot.lane.b32.xlu0 %v332, 32
  %v335 = vpop.permute.xlu0 %334
  %v337 = vadd.f32 %v327, %v335
  %v338 = vtanh.pop %v337
  %340 = vrot.lane.b32.xlu0 %v338, 64
  %v341 = vpop.permute.xlu0 %340
  %v343 = vmul.f32 %v323, %v341
  %v346 = vunpack.c.l.s4 1983009808
  %v347 = vunpack.c.0.s8 %v346
  %v348 = vlaneseq
  %v349 = vshrl.u32 %v348, 7
  %v350 = vsub.s32 %v347, %v349
  %v351 = vrot.slane %v343, %v350
  %v352 = vcombine.high %v351, %v351
  %353 = vrot.lane.b32.xlu0 %v352, 64
  %v354 = vpop.permute.xlu0 %353
  %vm356 = vcmask 517376
  %357 = vst.msk [vmem:[%s6] sm:$0x3] %vm356, %v354
  %v358 = vrot.slane %v343, 2
  %359 = vrot.lane.b32.xlu0 %v358, 32
  %v360 = vpop.permute.xlu0 %359
  %v361 = vsel %vm36, %v360, 0
  %363 = vmatprep.subr.mxu0 0.0
  %364 = vmatpush1.msra.mxu0 0.0
  %365 = vmatprep.subr.mxu0 0.0
  %366 = vmatpush1.msra.mxu0 0.0
  %367 = vmatprep.subr.mxu0 0.0
  %368 = vmatpush1.msra.mxu0 0.0
  %369 = vmatprep.subr.mxu0 0.0
  %370 = vmatpush1.msra.mxu0 0.0
  %371 = vmatprep.subr.mxu0 0.0
  %372 = vmatpush1.msra.mxu0 0.0
  %373 = vmatprep.subr.mxu0 0.0
  %374 = vmatpush1.msra.mxu0 0.0
  %375 = vmatprep.subr.mxu0 0.0
  %376 = vmatpush1.msra.mxu0 0.0
  %377 = vmatprep.subr.mxu0 0.0
  %378 = vmatpush1.msra.mxu0 0.0
  %379 = vmatprep.subr.mxu0 0.0
  %380 = vmatpush1.msra.mxu0 0.0
  %381 = vmatprep.subr.mxu0 0.0
  %382 = vmatpush1.msra.mxu0 0.0
  %383 = vmatprep.subr.mxu0 0.0
  %384 = vmatpush1.msra.mxu0 0.0
  %385 = vmatprep.subr.mxu0 0.0
  %386 = vmatpush1.msra.mxu0 0.0
  %387 = vmatprep.subr.mxu0 0.0
  %388 = vmatpush1.msra.mxu0 %v121
  %389 = vmatprep.subr.mxu0 0.0
  %390 = vmatpush1.msra.mxu0 %v120
  %391 = vmatprep.subr.mxu0 0.0
  %392 = vmatpush1.msra.mxu0 %v119
  %393 = vmatprep.subr.mxu0 0.0
  %394 = vmatpush1.msra.mxu0 %v118
  %395 = vmatprep.subr.mxu0 0.0
  %396 = vmatpush2.msra.mxu0 0.0
  %397 = vmatprep.subr.mxu0 0.0
  %398 = vmatpush2.msra.mxu0 0.0
  %399 = vmatprep.subr.mxu0 0.0
  %400 = vmatpush2.msra.mxu0 0.0
  %401 = vmatprep.subr.mxu0 0.0
  %402 = vmatpush2.msra.mxu0 0.0
  %403 = vmatprep.subr.mxu0 0.0
  %404 = vmatpush2.msra.mxu0 0.0
  %405 = vmatprep.subr.mxu0 0.0
  %406 = vmatpush2.msra.mxu0 0.0
  %407 = vmatprep.subr.mxu0 0.0
  %408 = vmatpush2.msra.mxu0 0.0
  %409 = vmatprep.subr.mxu0 0.0
  %410 = vmatpush2.msra.mxu0 0.0
  %411 = vmatprep.subr.mxu0 0.0
  %412 = vmatpush2.msra.mxu0 0.0
  %413 = vmatprep.subr.mxu0 0.0
  %414 = vmatpush2.msra.mxu0 0.0
  %415 = vmatprep.subr.mxu0 0.0
  %416 = vmatpush2.msra.mxu0 0.0
  %417 = vmatprep.subr.mxu0 0.0
  %418 = vmatpush2.msra.mxu0 0.0
  %419 = vmatprep.subr.mxu0 0.0
  %420 = vmatpush2.msra.mxu0 0.0
  %421 = vmatprep.subr.mxu0 0.0
  %422 = vmatpush2.msra.mxu0 0.0
  %423 = vmatprep.subr.mxu0 0.0
  %424 = vmatpush2.msra.mxu0 0.0
  %425 = vmatprep.subr.mxu0 0.0
  %426 = vmatpush2.msra.mxu0 0.0
  %427 = vmatprep.mubr.f32.mxu0 0.0
  %428 = vmatmul.mubr.f32.gmra.mxu0 %v361
  %v429 = vpop.f32.mrf.mxu0
  %v430 = vadd.f32 0.0, %v429
  %v431 = vpop.f32.mrf.mxu0
  %432 = vdwg.mxu0
  %v434 = vrot.slane %v430, 4
  %v436 = vadd.f32 %v110, %v434
  %v437 = vtanh.pop %v436
  %v438 = vmul.f32 %v437, %v203
  %v439 = vadd.f32 %v438, %v210
  %v441 = vrot.slane %v337, 6
  %v443 = vmul.f32 %v439, %v441
  %445 = vrot.lane.b32.xlu0 %v439, 64
  %v446 = vpop.permute.xlu0 %445
  %v448 = vmul.f32 %v439, %v446
  %450 = vrot.lane.b32.xlu0 %v448, 32
  %v451 = vpop.permute.xlu0 %450
  %v453 = vadd.f32 %v443, %v451
  %v454 = vtanh.pop %v453
  %456 = vrot.lane.b32.xlu0 %v454, 64
  %v457 = vpop.permute.xlu0 %456
  %v459 = vmul.f32 %v439, %v457
  %v461 = vcombine.high %v459, %v459
  %v463 = vunpack.c.l.s4 1983009808
  %v464 = vunpack.c.0.s8 %v463
  %v465 = vlaneseq
  %v466 = vshrl.u32 %v465, 7
  %v467 = vsub.s32 %v464, %v466
  %v468 = vrot.slane %v461, %v467
  %469 = vrot.lane.b32.xlu0 %v468, 96
  %v470 = vpop.permute.xlu0 %469
  %vm472 = vcmask 779776
  %473 = vst.msk [vmem:[%s6] sm:$0x3] %vm472, %v470
  %v474 = vrot.slane %v459, 4
  %475 = vrot.lane.b32.xlu0 %v474, 32
  %v476 = vpop.permute.xlu0 %475
  %v477 = vsel %vm36, %v476, 0
  %479 = vmatprep.subr.mxu0 0.0
  %480 = vmatpush1.msra.mxu0 0.0
  %481 = vmatprep.subr.mxu0 0.0
  %482 = vmatpush1.msra.mxu0 0.0
  %483 = vmatprep.subr.mxu0 0.0
  %484 = vmatpush1.msra.mxu0 0.0
  %485 = vmatprep.subr.mxu0 0.0
  %486 = vmatpush1.msra.mxu0 0.0
  %487 = vmatprep.subr.mxu0 0.0
  %488 = vmatpush1.msra.mxu0 0.0
  %489 = vmatprep.subr.mxu0 0.0
  %490 = vmatpush1.msra.mxu0 0.0
  %491 = vmatprep.subr.mxu0 0.0
  %492 = vmatpush1.msra.mxu0 0.0
  %493 = vmatprep.subr.mxu0 0.0
  %494 = vmatpush1.msra.mxu0 0.0
  %495 = vmatprep.subr.mxu0 0.0
  %496 = vmatpush1.msra.mxu0 0.0
  %497 = vmatprep.subr.mxu0 0.0
  %498 = vmatpush1.msra.mxu0 0.0
  %499 = vmatprep.subr.mxu0 0.0
  %500 = vmatpush1.msra.mxu0 0.0
  %501 = vmatprep.subr.mxu0 0.0
  %502 = vmatpush1.msra.mxu0 0.0
  %503 = vmatprep.subr.mxu0 0.0
  %504 = vmatpush1.msra.mxu0 %v121
  %505 = vmatprep.subr.mxu0 0.0
  %506 = vmatpush1.msra.mxu0 %v120
  %507 = vmatprep.subr.mxu0 0.0
  %508 = vmatpush1.msra.mxu0 %v119
  %509 = vmatprep.subr.mxu0 0.0
  %510 = vmatpush1.msra.mxu0 %v118
  %511 = vmatprep.subr.mxu0 0.0
  %512 = vmatpush2.msra.mxu0 0.0
  %513 = vmatprep.subr.mxu0 0.0
  %514 = vmatpush2.msra.mxu0 0.0
  %515 = vmatprep.subr.mxu0 0.0
  %516 = vmatpush2.msra.mxu0 0.0
  %517 = vmatprep.subr.mxu0 0.0
  %518 = vmatpush2.msra.mxu0 0.0
  %519 = vmatprep.subr.mxu0 0.0
  %520 = vmatpush2.msra.mxu0 0.0
  %521 = vmatprep.subr.mxu0 0.0
  %522 = vmatpush2.msra.mxu0 0.0
  %523 = vmatprep.subr.mxu0 0.0
  %524 = vmatpush2.msra.mxu0 0.0
  %525 = vmatprep.subr.mxu0 0.0
  %526 = vmatpush2.msra.mxu0 0.0
  %527 = vmatprep.subr.mxu0 0.0
  %528 = vmatpush2.msra.mxu0 0.0
  %529 = vmatprep.subr.mxu0 0.0
  %530 = vmatpush2.msra.mxu0 0.0
  %531 = vmatprep.subr.mxu0 0.0
  %532 = vmatpush2.msra.mxu0 0.0
  %533 = vmatprep.subr.mxu0 0.0
  %534 = vmatpush2.msra.mxu0 0.0
  %535 = vmatprep.subr.mxu0 0.0
  %536 = vmatpush2.msra.mxu0 0.0
  %537 = vmatprep.subr.mxu0 0.0
  %538 = vmatpush2.msra.mxu0 0.0
  %539 = vmatprep.subr.mxu0 0.0
  %540 = vmatpush2.msra.mxu0 0.0
  %541 = vmatprep.subr.mxu0 0.0
  %542 = vmatpush2.msra.mxu0 0.0
  %543 = vmatprep.mubr.f32.mxu0 0.0
  %544 = vmatmul.mubr.f32.gmra.mxu0 %v477
  %v545 = vpop.f32.mrf.mxu0
  %v546 = vadd.f32 0.0, %v545
  %v547 = vpop.f32.mrf.mxu0
  %548 = vdwg.mxu0
  %v550 = vrot.slane %v546, 2
  %v552 = vadd.f32 %v110, %v550
  %v553 = vtanh.pop %v552
  %v554 = vmul.f32 %v553, %v203
  %v555 = vadd.f32 %v554, %v210
  %v557 = vrot.slane %v453, 6
  %v559 = vmul.f32 %v555, %v557
  %561 = vrot.lane.b32.xlu0 %v555, 64
  %v562 = vpop.permute.xlu0 %561
  %v564 = vmul.f32 %v555, %v562
  %566 = vrot.lane.b32.xlu0 %v564, 32
  %v567 = vpop.permute.xlu0 %566
  %v569 = vadd.f32 %v559, %v567
  %v570 = vtanh.pop %v569
  %572 = vrot.lane.b32.xlu0 %v570, 64
  %v573 = vpop.permute.xlu0 %572
  %v575 = vmul.f32 %v555, %v573
  %v577 = vcombine.high %v575, %v575
  %v579 = vunpack.c.l.s4 1983009808
  %v580 = vunpack.c.0.s8 %v579
  %v581 = vlaneseq
  %v582 = vshrl.u32 %v581, 7
  %v583 = vsub.s32 %v580, %v582
  %v584 = vrot.slane %v577, %v583
  %v585 = vcombine.high %v584, %v584
  %vm587 = vcmask 1042176
  %588 = vst.msk [vmem:[%s6] sm:$0x3] %vm587, %v585
  %v589 = vrot.slane %v575, 6
  %590 = vrot.lane.b32.xlu0 %v589, 32
  %v591 = vpop.permute.xlu0 %590
  %v592 = vsel %vm36, %v591, 0
  %594 = vmatprep.subr.mxu0 0.0
  %595 = vmatpush1.msra.mxu0 0.0
  %596 = vmatprep.subr.mxu0 0.0
  %597 = vmatpush1.msra.mxu0 0.0
  %598 = vmatprep.subr.mxu0 0.0
  %599 = vmatpush1.msra.mxu0 0.0
  %600 = vmatprep.subr.mxu0 0.0
  %601 = vmatpush1.msra.mxu0 0.0
  %602 = vmatprep.subr.mxu0 0.0
  %603 = vmatpush1.msra.mxu0 0.0
  %604 = vmatprep.subr.mxu0 0.0
  %605 = vmatpush1.msra.mxu0 0.0
  %606 = vmatprep.subr.mxu0 0.0
  %607 = vmatpush1.msra.mxu0 0.0
  %608 = vmatprep.subr.mxu0 0.0
  %609 = vmatpush1.msra.mxu0 0.0
  %610 = vmatprep.subr.mxu0 0.0
  %611 = vmatpush1.msra.mxu0 0.0
  %612 = vmatprep.subr.mxu0 0.0
  %613 = vmatpush1.msra.mxu0 0.0
  %614 = vmatprep.subr.mxu0 0.0
  %615 = vmatpush1.msra.mxu0 0.0
  %616 = vmatprep.subr.mxu0 0.0
  %617 = vmatpush1.msra.mxu0 0.0
  %618 = vmatprep.subr.mxu0 0.0
  %619 = vmatpush1.msra.mxu0 %v121
  %620 = vmatprep.subr.mxu0 0.0
  %621 = vmatpush1.msra.mxu0 %v120
  %622 = vmatprep.subr.mxu0 0.0
  %623 = vmatpush1.msra.mxu0 %v119
  %624 = vmatprep.subr.mxu0 0.0
  %625 = vmatpush1.msra.mxu0 %v118
  %626 = vmatprep.subr.mxu0 0.0
  %627 = vmatpush2.msra.mxu0 0.0
  %628 = vmatprep.subr.mxu0 0.0
  %629 = vmatpush2.msra.mxu0 0.0
  %630 = vmatprep.subr.mxu0 0.0
  %631 = vmatpush2.msra.mxu0 0.0
  %632 = vmatprep.subr.mxu0 0.0
  %633 = vmatpush2.msra.mxu0 0.0
  %634 = vmatprep.subr.mxu0 0.0
  %635 = vmatpush2.msra.mxu0 0.0
  %636 = vmatprep.subr.mxu0 0.0
  %637 = vmatpush2.msra.mxu0 0.0
  %638 = vmatprep.subr.mxu0 0.0
  %639 = vmatpush2.msra.mxu0 0.0
  %640 = vmatprep.subr.mxu0 0.0
  %641 = vmatpush2.msra.mxu0 0.0
  %642 = vmatprep.subr.mxu0 0.0
  %643 = vmatpush2.msra.mxu0 0.0
  %644 = vmatprep.subr.mxu0 0.0
  %645 = vmatpush2.msra.mxu0 0.0
  %646 = vmatprep.subr.mxu0 0.0
  %647 = vmatpush2.msra.mxu0 0.0
  %648 = vmatprep.subr.mxu0 0.0
  %649 = vmatpush2.msra.mxu0 0.0
  %650 = vmatprep.subr.mxu0 0.0
  %651 = vmatpush2.msra.mxu0 0.0
  %652 = vmatprep.subr.mxu0 0.0
  %653 = vmatpush2.msra.mxu0 0.0
  %654 = vmatprep.subr.mxu0 0.0
  %655 = vmatpush2.msra.mxu0 0.0
  %656 = vmatprep.subr.mxu0 0.0
  %657 = vmatpush2.msra.mxu0 0.0
  %658 = vmatprep.mubr.f32.mxu0 0.0
  %659 = vmatmul.mubr.f32.gmra.mxu0 %v592
  %v660 = vpop.f32.mrf.mxu0
  %v661 = vadd.f32 0.0, %v660
  %v662 = vpop.f32.mrf.mxu0
  %663 = vdwg.mxu0
  %v664 = vadd.f32 %v115, %v661
  %v665 = vtanh.pop %v664
  %v666 = vmul.f32 %v665, %v203
  %v667 = vadd.f32 %v666, %v210
  %v669 = vrot.slane %v569, 6
  %v671 = vmul.f32 %v667, %v669
  %673 = vrot.lane.b32.xlu0 %v667, 64
  %v674 = vpop.permute.xlu0 %673
  %v676 = vmul.f32 %v667, %v674
  %678 = vrot.lane.b32.xlu0 %v676, 32
  %v679 = vpop.permute.xlu0 %678
  %v681 = vadd.f32 %v671, %v679
  %v682 = vtanh.pop %v681
  %684 = vrot.lane.b32.xlu0 %v682, 64
  %v685 = vpop.permute.xlu0 %684
  %v687 = vmul.f32 %v667, %v685
  %v690 = vunpack.c.l.s4 1983009808
  %v691 = vunpack.c.0.s8 %v690
  %v692 = vlaneseq
  %v693 = vshrl.u32 %v692, 7
  %v694 = vsub.s32 %v691, %v693
  %v695 = vrot.slane %v687, %v694
  %696 = vrot.lane.b32.xlu0 %v695, 32
  %v697 = vpop.permute.xlu0 %696
  %699 = vst.msk [vmem:[%s6 + $0x2] sm:$0x3] %vm241, %v697
  %700 = vrot.lane.b32.xlu0 %v687, 32
  %v701 = vpop.permute.xlu0 %700
  %v702 = vsel %vm36, %v701, 0
  %704 = vmatprep.subr.mxu0 0.0
  %705 = vmatpush1.msra.mxu0 0.0
  %706 = vmatprep.subr.mxu0 0.0
  %707 = vmatpush1.msra.mxu0 0.0
  %708 = vmatprep.subr.mxu0 0.0
  %709 = vmatpush1.msra.mxu0 0.0
  %710 = vmatprep.subr.mxu0 0.0
  %711 = vmatpush1.msra.mxu0 0.0
  %712 = vmatprep.subr.mxu0 0.0
  %713 = vmatpush1.msra.mxu0 0.0
  %714 = vmatprep.subr.mxu0 0.0
  %715 = vmatpush1.msra.mxu0 0.0
  %716 = vmatprep.subr.mxu0 0.0
  %717 = vmatpush1.msra.mxu0 0.0
  %718 = vmatprep.subr.mxu0 0.0
  %719 = vmatpush1.msra.mxu0 0.0
  %720 = vmatprep.subr.mxu0 0.0
  %721 = vmatpush1.msra.mxu0 0.0
  %722 = vmatprep.subr.mxu0 0.0
  %723 = vmatpush1.msra.mxu0 0.0
  %724 = vmatprep.subr.mxu0 0.0
  %725 = vmatpush1.msra.mxu0 0.0
  %726 = vmatprep.subr.mxu0 0.0
  %727 = vmatpush1.msra.mxu0 0.0
  %728 = vmatprep.subr.mxu0 0.0
  %729 = vmatpush1.msra.mxu0 %v121
  %730 = vmatprep.subr.mxu0 0.0
  %731 = vmatpush1.msra.mxu0 %v120
  %732 = vmatprep.subr.mxu0 0.0
  %733 = vmatpush1.msra.mxu0 %v119
  %734 = vmatprep.subr.mxu0 0.0
  %735 = vmatpush1.msra.mxu0 %v118
  %736 = vmatprep.subr.mxu0 0.0
  %737 = vmatpush2.msra.mxu0 0.0
  %738 = vmatprep.subr.mxu0 0.0
  %739 = vmatpush2.msra.mxu0 0.0
  %740 = vmatprep.subr.mxu0 0.0
  %741 = vmatpush2.msra.mxu0 0.0
  %742 = vmatprep.subr.mxu0 0.0
  %743 = vmatpush2.msra.mxu0 0.0
  %744 = vmatprep.subr.mxu0 0.0
  %745 = vmatpush2.msra.mxu0 0.0
  %746 = vmatprep.subr.mxu0 0.0
  %747 = vmatpush2.msra.mxu0 0.0
  %748 = vmatprep.subr.mxu0 0.0
  %749 = vmatpush2.msra.mxu0 0.0
  %750 = vmatprep.subr.mxu0 0.0
  %751 = vmatpush2.msra.mxu0 0.0
  %752 = vmatprep.subr.mxu0 0.0
  %753 = vmatpush2.msra.mxu0 0.0
  %754 = vmatprep.subr.mxu0 0.0
  %755 = vmatpush2.msra.mxu0 0.0
  %756 = vmatprep.subr.mxu0 0.0
  %757 = vmatpush2.msra.mxu0 0.0
  %758 = vmatprep.subr.mxu0 0.0
  %759 = vmatpush2.msra.mxu0 0.0
  %760 = vmatprep.subr.mxu0 0.0
  %761 = vmatpush2.msra.mxu0 0.0
  %762 = vmatprep.subr.mxu0 0.0
  %763 = vmatpush2.msra.mxu0 0.0
  %764 = vmatprep.subr.mxu0 0.0
  %765 = vmatpush2.msra.mxu0 0.0
  %766 = vmatprep.subr.mxu0 0.0
  %767 = vmatpush2.msra.mxu0 0.0
  %768 = vmatprep.mubr.f32.mxu0 0.0
  %769 = vmatmul.mubr.f32.gmra.mxu0 %v702
  %v770 = vpop.f32.mrf.mxu0
  %v771 = vadd.f32 0.0, %v770
  %v772 = vpop.f32.mrf.mxu0
  %773 = vdwg.mxu0
  %v775 = vrot.slane %v771, 6
  %v777 = vadd.f32 %v115, %v775
  %v778 = vtanh.pop %v777
  %v779 = vmul.f32 %v778, %v203
  %v780 = vadd.f32 %v779, %v210
  %v782 = vrot.slane %v681, 6
  %v784 = vmul.f32 %v780, %v782
  %786 = vrot.lane.b32.xlu0 %v780, 64
  %v787 = vpop.permute.xlu0 %786
  %v789 = vmul.f32 %v780, %v787
  %791 = vrot.lane.b32.xlu0 %v789, 32
  %v792 = vpop.permute.xlu0 %791
  %v794 = vadd.f32 %v784, %v792
  %v795 = vtanh.pop %v794
  %797 = vrot.lane.b32.xlu0 %v795, 64
  %v798 = vpop.permute.xlu0 %797
  %v800 = vmul.f32 %v780, %v798
  %v803 = vunpack.c.l.s4 1983009808
  %v804 = vunpack.c.0.s8 %v803
  %v805 = vlaneseq
  %v806 = vshrl.u32 %v805, 7
  %v807 = vsub.s32 %v804, %v806
  %v808 = vrot.slane %v800, %v807
  %v809 = vcombine.high %v808, %v808
  %810 = vrot.lane.b32.xlu0 %v809, 64
  %v811 = vpop.permute.xlu0 %810
  %813 = vst.msk [vmem:[%s6 + $0x2] sm:$0x3] %vm356, %v811
  %v814 = vrot.slane %v800, 2
  %815 = vrot.lane.b32.xlu0 %v814, 32
  %v816 = vpop.permute.xlu0 %815
  %v817 = vsel %vm36, %v816, 0
  %819 = vmatprep.subr.mxu0 0.0
  %820 = vmatpush1.msra.mxu0 0.0
  %821 = vmatprep.subr.mxu0 0.0
  %822 = vmatpush1.msra.mxu0 0.0
  %823 = vmatprep.subr.mxu0 0.0
  %824 = vmatpush1.msra.mxu0 0.0
  %825 = vmatprep.subr.mxu0 0.0
  %826 = vmatpush1.msra.mxu0 0.0
  %827 = vmatprep.subr.mxu0 0.0
  %828 = vmatpush1.msra.mxu0 0.0
  %829 = vmatprep.subr.mxu0 0.0
  %830 = vmatpush1.msra.mxu0 0.0
  %831 = vmatprep.subr.mxu0 0.0
  %832 = vmatpush1.msra.mxu0 0.0
  %833 = vmatprep.subr.mxu0 0.0
  %834 = vmatpush1.msra.mxu0 0.0
  %835 = vmatprep.subr.mxu0 0.0
  %836 = vmatpush1.msra.mxu0 0.0
  %837 = vmatprep.subr.mxu0 0.0
  %838 = vmatpush1.msra.mxu0 0.0
  %839 = vmatprep.subr.mxu0 0.0
  %840 = vmatpush1.msra.mxu0 0.0
  %841 = vmatprep.subr.mxu0 0.0
  %842 = vmatpush1.msra.mxu0 0.0
  %843 = vmatprep.subr.mxu0 0.0
  %844 = vmatpush1.msra.mxu0 %v121
  %845 = vmatprep.subr.mxu0 0.0
  %846 = vmatpush1.msra.mxu0 %v120
  %847 = vmatprep.subr.mxu0 0.0
  %848 = vmatpush1.msra.mxu0 %v119
  %849 = vmatprep.subr.mxu0 0.0
  %850 = vmatpush1.msra.mxu0 %v118
  %851 = vmatprep.subr.mxu0 0.0
  %852 = vmatpush2.msra.mxu0 0.0
  %853 = vmatprep.subr.mxu0 0.0
  %854 = vmatpush2.msra.mxu0 0.0
  %855 = vmatprep.subr.mxu0 0.0
  %856 = vmatpush2.msra.mxu0 0.0
  %857 = vmatprep.subr.mxu0 0.0
  %858 = vmatpush2.msra.mxu0 0.0
  %859 = vmatprep.subr.mxu0 0.0
  %860 = vmatpush2.msra.mxu0 0.0
  %861 = vmatprep.subr.mxu0 0.0
  %862 = vmatpush2.msra.mxu0 0.0
  %863 = vmatprep.subr.mxu0 0.0
  %864 = vmatpush2.msra.mxu0 0.0
  %865 = vmatprep.subr.mxu0 0.0
  %866 = vmatpush2.msra.mxu0 0.0
  %867 = vmatprep.subr.mxu0 0.0
  %868 = vmatpush2.msra.mxu0 0.0
  %869 = vmatprep.subr.mxu0 0.0
  %870 = vmatpush2.msra.mxu0 0.0
  %871 = vmatprep.subr.mxu0 0.0
  %872 = vmatpush2.msra.mxu0 0.0
  %873 = vmatprep.subr.mxu0 0.0
  %874 = vmatpush2.msra.mxu0 0.0
  %875 = vmatprep.subr.mxu0 0.0
  %876 = vmatpush2.msra.mxu0 0.0
  %877 = vmatprep.subr.mxu0 0.0
  %878 = vmatpush2.msra.mxu0 0.0
  %879 = vmatprep.subr.mxu0 0.0
  %880 = vmatpush2.msra.mxu0 0.0
  %881 = vmatprep.subr.mxu0 0.0
  %882 = vmatpush2.msra.mxu0 0.0
  %883 = vmatprep.mubr.f32.mxu0 0.0
  %884 = vmatmul.mubr.f32.gmra.mxu0 %v817
  %v885 = vpop.f32.mrf.mxu0
  %v886 = vadd.f32 0.0, %v885
  %v887 = vpop.f32.mrf.mxu0
  %888 = vdwg.mxu0
  %v890 = vrot.slane %v886, 4
  %v892 = vadd.f32 %v115, %v890
  %v893 = vtanh.pop %v892
  %v894 = vmul.f32 %v893, %v203
  %v895 = vadd.f32 %v894, %v210
  %v897 = vrot.slane %v794, 6
  %v899 = vmul.f32 %v895, %v897
  %901 = vrot.lane.b32.xlu0 %v895, 64
  %v902 = vpop.permute.xlu0 %901
  %v904 = vmul.f32 %v895, %v902
  %906 = vrot.lane.b32.xlu0 %v904, 32
  %v907 = vpop.permute.xlu0 %906
  %v909 = vadd.f32 %v899, %v907
  %v910 = vtanh.pop %v909
  %912 = vrot.lane.b32.xlu0 %v910, 64
  %v913 = vpop.permute.xlu0 %912
  %v915 = vmul.f32 %v895, %v913
  %v917 = vcombine.high %v915, %v915
  %v919 = vunpack.c.l.s4 1983009808
  %v920 = vunpack.c.0.s8 %v919
  %v921 = vlaneseq
  %v922 = vshrl.u32 %v921, 7
  %v923 = vsub.s32 %v920, %v922
  %v924 = vrot.slane %v917, %v923
  %925 = vrot.lane.b32.xlu0 %v924, 96
  %v926 = vpop.permute.xlu0 %925
  %928 = vst.msk [vmem:[%s6 + $0x2] sm:$0x3] %vm472, %v926
  %v929 = vrot.slane %v915, 4
  %930 = vrot.lane.b32.xlu0 %v929, 32
  %v931 = vpop.permute.xlu0 %930
  %v932 = vsel %vm36, %v931, 0
  %934 = vmatprep.subr.mxu0 0.0
  %935 = vmatpush1.msra.mxu0 0.0
  %936 = vmatprep.subr.mxu0 0.0
  %937 = vmatpush1.msra.mxu0 0.0
  %938 = vmatprep.subr.mxu0 0.0
  %939 = vmatpush1.msra.mxu0 0.0
  %940 = vmatprep.subr.mxu0 0.0
  %941 = vmatpush1.msra.mxu0 0.0
  %942 = vmatprep.subr.mxu0 0.0
  %943 = vmatpush1.msra.mxu0 0.0
  %944 = vmatprep.subr.mxu0 0.0
  %945 = vmatpush1.msra.mxu0 0.0
  %946 = vmatprep.subr.mxu0 0.0
  %947 = vmatpush1.msra.mxu0 0.0
  %948 = vmatprep.subr.mxu0 0.0
  %949 = vmatpush1.msra.mxu0 0.0
  %950 = vmatprep.subr.mxu0 0.0
  %951 = vmatpush1.msra.mxu0 0.0
  %952 = vmatprep.subr.mxu0 0.0
  %953 = vmatpush1.msra.mxu0 0.0
  %954 = vmatprep.subr.mxu0 0.0
  %955 = vmatpush1.msra.mxu0 0.0
  %956 = vmatprep.subr.mxu0 0.0
  %957 = vmatpush1.msra.mxu0 0.0
  %958 = vmatprep.subr.mxu0 0.0
  %959 = vmatpush1.msra.mxu0 %v121
  %960 = vmatprep.subr.mxu0 0.0
  %961 = vmatpush1.msra.mxu0 %v120
  %962 = vmatprep.subr.mxu0 0.0
  %963 = vmatpush1.msra.mxu0 %v119
  %964 = vmatprep.subr.mxu0 0.0
  %965 = vmatpush1.msra.mxu0 %v118
  %966 = vmatprep.subr.mxu0 0.0
  %967 = vmatpush2.msra.mxu0 0.0
  %968 = vmatprep.subr.mxu0 0.0
  %969 = vmatpush2.msra.mxu0 0.0
  %970 = vmatprep.subr.mxu0 0.0
  %971 = vmatpush2.msra.mxu0 0.0
  %972 = vmatprep.subr.mxu0 0.0
  %973 = vmatpush2.msra.mxu0 0.0
  %974 = vmatprep.subr.mxu0 0.0
  %975 = vmatpush2.msra.mxu0 0.0
  %976 = vmatprep.subr.mxu0 0.0
  %977 = vmatpush2.msra.mxu0 0.0
  %978 = vmatprep.subr.mxu0 0.0
  %979 = vmatpush2.msra.mxu0 0.0
  %980 = vmatprep.subr.mxu0 0.0
  %981 = vmatpush2.msra.mxu0 0.0
  %982 = vmatprep.subr.mxu0 0.0
  %983 = vmatpush2.msra.mxu0 0.0
  %984 = vmatprep.subr.mxu0 0.0
  %985 = vmatpush2.msra.mxu0 0.0
  %986 = vmatprep.subr.mxu0 0.0
  %987 = vmatpush2.msra.mxu0 0.0
  %988 = vmatprep.subr.mxu0 0.0
  %989 = vmatpush2.msra.mxu0 0.0
  %990 = vmatprep.subr.mxu0 0.0
  %991 = vmatpush2.msra.mxu0 0.0
  %992 = vmatprep.subr.mxu0 0.0
  %993 = vmatpush2.msra.mxu0 0.0
  %994 = vmatprep.subr.mxu0 0.0
  %995 = vmatpush2.msra.mxu0 0.0
  %996 = vmatprep.subr.mxu0 0.0
  %997 = vmatpush2.msra.mxu0 0.0
  %998 = vmatprep.mubr.f32.mxu0 0.0
  %999 = vmatmul.mubr.f32.gmra.mxu0 %v932
  %v1000 = vpop.f32.mrf.mxu0
  %v1001 = vadd.f32 0.0, %v1000
  %v1002 = vpop.f32.mrf.mxu0
  %1003 = vdwg.mxu0
  %v1005 = vrot.slane %v1001, 2
  %v1007 = vadd.f32 %v115, %v1005
  %v1008 = vtanh.pop %v1007
  %v1009 = vmul.f32 %v1008, %v203
  %v1010 = vadd.f32 %v1009, %v210
  %v1012 = vrot.slane %v909, 6
  %v1014 = vmul.f32 %v1010, %v1012
  %1016 = vrot.lane.b32.xlu0 %v1010, 64
  %v1017 = vpop.permute.xlu0 %1016
  %v1019 = vmul.f32 %v1010, %v1017
  %1021 = vrot.lane.b32.xlu0 %v1019, 32
  %v1022 = vpop.permute.xlu0 %1021
  %v1024 = vadd.f32 %v1014, %v1022
  %v1025 = vtanh.pop %v1024
  %1027 = vrot.lane.b32.xlu0 %v1025, 64
  %v1028 = vpop.permute.xlu0 %1027
  %v1030 = vmul.f32 %v1010, %v1028
  %v1032 = vcombine.high %v1030, %v1030
  %v1034 = vunpack.c.l.s4 1983009808
  %v1035 = vunpack.c.0.s8 %v1034
  %v1036 = vlaneseq
  %v1037 = vshrl.u32 %v1036, 7
  %v1038 = vsub.s32 %v1035, %v1037
  %v1039 = vrot.slane %v1032, %v1038
  %v1040 = vcombine.high %v1039, %v1039
  %1042 = vst.msk [vmem:[%s6 + $0x2] sm:$0x3] %vm587, %v1040
  // Predicated region
  $region26: #{lstm_forward.1} parent=0 // pred_check
    _
  $region27: #{lstm_forward.1} parent=0 // pred_check_branch
    %1044 = sbr.rel (0) target = $region29
  $region28: #{lstm_forward.1} parent=0 // pred_region
    _
  $region29: #{lstm_forward.1} parent=0 // pred_fallthru
    _
  // Predicated region
  $region30: #{lstm_forward.1} parent=0 // pred_check
    _
  $region31: #{lstm_forward.1} parent=0 // pred_check_branch
    %1046 = sbr.rel (0) target = $region33
  $region32: #{lstm_forward.1} parent=0 // pred_region
    _
  $region33: #{lstm_forward.1} parent=0 // pred_fallthru
    _

</llo_original>
